<compile_context>
chip_gen: v7x
topology: tpu7x:2x2x1
jax: 0.10.0
libtpu: 0.0.40
codegen_flags: <defaults>
</compile_context>

<pallas_src>
import math
import functools

import jax
import jax.numpy as jnp
from jax import lax
from jax.experimental import pallas as pl
from jax.experimental.pallas import tpu as pltpu


# ---------------------------------------------------------------------------
# Kernel 1: fused q/k/v projections (bf16 MXU operands, f32 accumulation).
# ---------------------------------------------------------------------------
def qkv_proj_kernel(x_ref, wq_ref, bq_ref, wk_ref, bk_ref, wv_ref, bv_ref,
                    q_ref, k_ref, v_ref, *, inv_sqrt_c):
    x = x_ref[0].astype(jnp.bfloat16)                                  # (tm, C)
    q = jnp.dot(x, wq_ref[...], preferred_element_type=jnp.float32) + bq_ref[...]
    k = jnp.dot(x, wk_ref[...], preferred_element_type=jnp.float32) + bk_ref[...]
    v = jnp.dot(x, wv_ref[...], preferred_element_type=jnp.float32) + bv_ref[...]
    # Fold the 1/sqrt(C) score scale into q (T*C muls instead of T*T).
    q_ref[0] = (q * inv_sqrt_c).astype(jnp.bfloat16)
    k_ref[0] = k.astype(jnp.bfloat16)
    v_ref[0] = v.astype(jnp.bfloat16)


# ---------------------------------------------------------------------------
# Kernel 2: flash-attention style softmax(q k^T) v with online softmax.
# ---------------------------------------------------------------------------
def flash_attn_kernel(q_ref, k_ref, v_ref, o_ref, m_sc, l_sc, acc_sc):
    kv = pl.program_id(2)

    @pl.when(kv == 0)
    def _():
        m_sc[...] = jnp.full(m_sc.shape, -jnp.inf, dtype=m_sc.dtype)
        l_sc[...] = jnp.zeros(l_sc.shape, dtype=l_sc.dtype)
        acc_sc[...] = jnp.zeros(acc_sc.shape, dtype=acc_sc.dtype)

    q = q_ref[0]                                  # (tq, C) bf16, pre-scaled by 1/sqrt(C)
    k = k_ref[0]                                  # (tk, C) bf16
    # Contract the last dims directly -- no materialized k transpose through the XLU.
    s = lax.dot_general(q, k, (((1,), (1,)), ((), ())),
                        preferred_element_type=jnp.float32)            # (tq, tk) f32

    m_prev = m_sc[...]
    m_new = jnp.maximum(m_prev, jnp.max(s, axis=-1, keepdims=True))
    alpha = jnp.exp(m_prev - m_new)
    p = jnp.exp(s - m_new)
    l_sc[...] = alpha * l_sc[...] + jnp.sum(p, axis=-1, keepdims=True)
    acc_sc[...] = alpha * acc_sc[...] + jnp.dot(
        p.astype(jnp.bfloat16), v_ref[0], preferred_element_type=jnp.float32)
    m_sc[...] = m_new

    @pl.when(kv == pl.num_programs(2) - 1)
    def _():
        # Deferred normalization: reciprocal on the EUP, applied to (tq, C)
        # instead of dividing the (tq, tk) probability matrix every step.
        inv_l = pl.reciprocal(l_sc[...], approx=True)
        o_ref[0] = (acc_sc[...] * inv_l).astype(o_ref.dtype)


# ---------------------------------------------------------------------------
# Wrapper
# ---------------------------------------------------------------------------
def _seq_tile(T):
    # MXU-friendly multiples of 128 (256/512 where they divide); tiny
    # sequences fall back to a single full-sequence tile.
    for t in (512, 256, 128):
        if T % t == 0:
            return t
    return T


def _vmem_limit(nbytes):
    # Scoped-VMEM limit from the actual footprint with 2x headroom, bounded so
    # it fits every generation (v7x physical VMEM is 64 MiB).
    return int(min(64 * 2**20, max(16 * 2**20, 2 * nbytes)))


def lsh_attention(x, params):
    B, T, C = x.shape
    wq, bq, wk, bk, wv, bv = params
    tm = _seq_tile(T)
    tq = _seq_tile(T)
    tk = _seq_tile(T)
    assert T % tm == 0 and T % tq == 0 and T % tk == 0

    # bf16 weights: native MXU rate, half the resident VMEM footprint.
    wq_b = wq.astype(jnp.bfloat16)
    wk_b = wk.astype(jnp.bfloat16)
    wv_b = wv.astype(jnp.bfloat16)

    const_spec = lambda shape: pl.BlockSpec(shape, lambda b, i: (0,) * len(shape))

    qkv_bytes = (2 * tm * C * 4            # x tile (double-buffered)
                 + 3 * C * C * 2           # bf16 weights (resident)
                 + 3 * C * 4               # biases
                 + 2 * 3 * tm * C * 2)     # q/k/v output tiles (double-buffered)

    q, k, v = pl.pallas_call(
        functools.partial(qkv_proj_kernel, inv_sqrt_c=1.0 / math.sqrt(C)),
        out_shape=(jax.ShapeDtypeStruct((B, T, C), jnp.bfloat16),) * 3,
        grid_spec=pltpu.PrefetchScalarGridSpec(
            num_scalar_prefetch=0,
            grid=(B, T // tm),
            in_specs=[
                pl.BlockSpec((1, tm, C), lambda b, i: (b, i, 0)),    # x
                const_spec((C, C)), const_spec((1, C)),              # Wq, bq
                const_spec((C, C)), const_spec((1, C)),              # Wk, bk
                const_spec((C, C)), const_spec((1, C)),              # Wv, bv
            ],
            out_specs=tuple(
                pl.BlockSpec((1, tm, C), lambda b, i: (b, i, 0)) for _ in range(3)),
        ),
        compiler_params=pltpu.CompilerParams(
            dimension_semantics=("parallel", "parallel"),
            vmem_limit_bytes=_vmem_limit(qkv_bytes)),
    )(x, wq_b, bq, wk_b, bk, wv_b, bv)

    flash_bytes = (2 * tq * C * 2          # q tile
                   + 2 * 2 * tk * C * 2    # k, v tiles (double-buffered)
                   + 2 * tq * C * 4        # output tile
                   + (tq * (C + 2)) * 4)   # m/l/acc scratch

    out = pl.pallas_call(
        flash_attn_kernel,
        out_shape=jax.ShapeDtypeStruct((B, T, C), jnp.float32),
        grid_spec=pltpu.PrefetchScalarGridSpec(
            num_scalar_prefetch=0,
            grid=(B, T // tq, T // tk),
            in_specs=[
                pl.BlockSpec((1, tq, C), lambda b, qi, ki: (b, qi, 0)),  # q
                pl.BlockSpec((1, tk, C), lambda b, qi, ki: (b, ki, 0)),  # k
                pl.BlockSpec((1, tk, C), lambda b, qi, ki: (b, ki, 0)),  # v
            ],
            out_specs=pl.BlockSpec((1, tq, C), lambda b, qi, ki: (b, qi, 0)),
            scratch_shapes=[
                pltpu.VMEM((tq, 1), jnp.float32),    # running max m
                pltpu.VMEM((tq, 1), jnp.float32),    # running denom l
                pltpu.VMEM((tq, C), jnp.float32),    # output accumulator
            ],
        ),
        compiler_params=pltpu.CompilerParams(
            dimension_semantics=("parallel", "parallel", "arbitrary"),
            vmem_limit_bytes=_vmem_limit(flash_bytes)),
    )(q, k, v)
    return out


# ---------------------------------------------------------------------------
# Params / pure-JAX reference / test
# ---------------------------------------------------------------------------
def init_params(key, n_embd):
    C = n_embd
    ks = jax.random.split(key, 3)

    def linear(k, fan_in, fan_out):
        kw, kb = jax.random.split(k)
        bound = 1.0 / math.sqrt(fan_in)
        w = jax.random.uniform(kw, (fan_in, fan_out), jnp.float32, -bound, bound)
        b = jax.random.uniform(kb, (1, fan_out), jnp.float32, -bound, bound)
        return w, b

    wq, bq = linear(ks[0], C, C)
    wk, bk = linear(ks[1], C, C)
    wv, bv = linear(ks[2], C, C)
    # TODO(synk): the `projections` parameter (only feeds hash_vectors, whose
    # buckets are discarded) does not influence the output; not instantiated.
    return (wq, bq, wk, bk, wv, bv)


def lsh_attention_ref(x, params):
    """Pure-JAX f32 reference mirroring LSHAttention.forward (buckets unused)."""
    wq, bq, wk, bk, wv, bv = params
    C = x.shape[-1]
    q = x @ wq + bq
    k = x @ wk + bk
    v = x @ wv + bv
    scores = jnp.einsum('btc,bsc->bts', q, k) / math.sqrt(C)
    attn = jax.nn.softmax(scores, axis=-1)
    return jnp.einsum('bts,bsc->btc', attn, v)


if __name__ == "__main__":
    B, T, C = 2, 8, 32   # batch, seq, n_embd (n_buckets / n_hashes don't affect output)

    key = jax.random.PRNGKey(0)
    kx, kp = jax.random.split(key)
    x = jax.random.normal(kx, (B, T, C), jnp.float32)
    params = init_params(kp, C)

    out = jax.block_until_ready(lsh_attention(x, params))
    ref = lsh_attention_ref(x, params)

    assert out.shape == (B, T, C)
    err = float(jnp.max(jnp.abs(out - ref)))
    # bf16 MXU operands + approx reciprocal => looser tolerance vs f32 reference.
    assert jnp.allclose(out, ref, atol=2e-2, rtol=2e-2), f"max abs err {err}"

    print("KERNEL_OK")
</pallas_src>

<mosaic_0001>
module attributes {stable_mosaic.version = 11 : i64} {
  func.func @qkv_proj_kernel(%arg0: i32, %arg1: i32, %arg2: memref<1x8x32xf32, #tpu.memory_space<vmem>>, %arg3: memref<32x32xbf16, #tpu.memory_space<vmem>>, %arg4: memref<1x32xf32, #tpu.memory_space<vmem>>, %arg5: memref<32x32xbf16, #tpu.memory_space<vmem>>, %arg6: memref<1x32xf32, #tpu.memory_space<vmem>>, %arg7: memref<32x32xbf16, #tpu.memory_space<vmem>>, %arg8: memref<1x32xf32, #tpu.memory_space<vmem>>, %arg9: memref<1x8x32xbf16, #tpu.memory_space<vmem>>, %arg10: memref<1x8x32xbf16, #tpu.memory_space<vmem>>, %arg11: memref<1x8x32xbf16, #tpu.memory_space<vmem>>) attributes {dimension_semantics = [#tpu.dimension_semantics<parallel>, #tpu.dimension_semantics<parallel>], iteration_bounds = array<i64: 2, 1>, scalar_prefetch = 0 : i64, scratch_operands = 0 : i64, tpu.core_type = #tpu.core_type<tc>, window_params = [{transform_indices = @transform_0, window_bounds = array<i64: 1, 8, 32>}, {pipeline_mode = #tpu.pipeline_mode<synchronous>, transform_indices = @transform_1, window_bounds = array<i64: 32, 32>}, {pipeline_mode = #tpu.pipeline_mode<synchronous>, transform_indices = @transform_2, window_bounds = array<i64: 1, 32>}, {pipeline_mode = #tpu.pipeline_mode<synchronous>, transform_indices = @transform_3, window_bounds = array<i64: 32, 32>}, {pipeline_mode = #tpu.pipeline_mode<synchronous>, transform_indices = @transform_4, window_bounds = array<i64: 1, 32>}, {pipeline_mode = #tpu.pipeline_mode<synchronous>, transform_indices = @transform_5, window_bounds = array<i64: 32, 32>}, {pipeline_mode = #tpu.pipeline_mode<synchronous>, transform_indices = @transform_6, window_bounds = array<i64: 1, 32>}, {transform_indices = @transform_7, window_bounds = array<i64: 1, 8, 32>}, {transform_indices = @transform_8, window_bounds = array<i64: 1, 8, 32>}, {transform_indices = @transform_9, window_bounds = array<i64: 1, 8, 32>}]} {
    %c0 = arith.constant 0 : index
    %c0_0 = arith.constant 0 : index
    %c0_1 = arith.constant 0 : index
    %0 = vector.load %arg2[%c0, %c0_0, %c0_1] : memref<1x8x32xf32, #tpu.memory_space<vmem>>, vector<1x8x32xf32>
    %1 = vector.shape_cast %0 : vector<1x8x32xf32> to vector<8x32xf32>
    %2 = arith.truncf %1 : vector<8x32xf32> to vector<8x32xbf16>
    %c0_2 = arith.constant 0 : index
    %c0_3 = arith.constant 0 : index
    %3 = vector.load %arg3[%c0_2, %c0_3] : memref<32x32xbf16, #tpu.memory_space<vmem>>, vector<32x32xbf16>
    %cst = arith.constant dense<0.000000e+00> : vector<8x32xf32>
    %4 = tpu.matmul %2, %3, %cst {dimension_numbers = #tpu.dot_dimension_numbers<[1], [0], [0], [1], [0, 0, 1, 1], [], []>} : vector<8x32xbf16>, vector<32x32xbf16>, vector<8x32xf32> -> vector<8x32xf32>
    %c0_4 = arith.constant 0 : index
    %c0_5 = arith.constant 0 : index
    %5 = vector.load %arg4[%c0_4, %c0_5] : memref<1x32xf32, #tpu.memory_space<vmem>>, vector<1x32xf32>
    %6 = vector.broadcast %5 : vector<1x32xf32> to vector<8x32xf32>
    %7 = arith.addf %4, %6 : vector<8x32xf32>
    %c0_6 = arith.constant 0 : index
    %c0_7 = arith.constant 0 : index
    %8 = vector.load %arg5[%c0_6, %c0_7] : memref<32x32xbf16, #tpu.memory_space<vmem>>, vector<32x32xbf16>
    %cst_8 = arith.constant dense<0.000000e+00> : vector<8x32xf32>
    %9 = tpu.matmul %2, %8, %cst_8 {dimension_numbers = #tpu.dot_dimension_numbers<[1], [0], [0], [1], [0, 0, 1, 1], [], []>} : vector<8x32xbf16>, vector<32x32xbf16>, vector<8x32xf32> -> vector<8x32xf32>
    %c0_9 = arith.constant 0 : index
    %c0_10 = arith.constant 0 : index
    %10 = vector.load %arg6[%c0_9, %c0_10] : memref<1x32xf32, #tpu.memory_space<vmem>>, vector<1x32xf32>
    %11 = vector.broadcast %10 : vector<1x32xf32> to vector<8x32xf32>
    %12 = arith.addf %9, %11 : vector<8x32xf32>
    %c0_11 = arith.constant 0 : index
    %c0_12 = arith.constant 0 : index
    %13 = vector.load %arg7[%c0_11, %c0_12] : memref<32x32xbf16, #tpu.memory_space<vmem>>, vector<32x32xbf16>
    %cst_13 = arith.constant dense<0.000000e+00> : vector<8x32xf32>
    %14 = tpu.matmul %2, %13, %cst_13 {dimension_numbers = #tpu.dot_dimension_numbers<[1], [0], [0], [1], [0, 0, 1, 1], [], []>} : vector<8x32xbf16>, vector<32x32xbf16>, vector<8x32xf32> -> vector<8x32xf32>
    %c0_14 = arith.constant 0 : index
    %c0_15 = arith.constant 0 : index
    %15 = vector.load %arg8[%c0_14, %c0_15] : memref<1x32xf32, #tpu.memory_space<vmem>>, vector<1x32xf32>
    %16 = vector.broadcast %15 : vector<1x32xf32> to vector<8x32xf32>
    %17 = arith.addf %14, %16 : vector<8x32xf32>
    %cst_16 = arith.constant 0.176776692 : f32
    %18 = vector.broadcast %cst_16 : f32 to vector<8x32xf32>
    %19 = arith.mulf %7, %18 : vector<8x32xf32>
    %20 = arith.truncf %19 : vector<8x32xf32> to vector<8x32xbf16>
    %c0_17 = arith.constant 0 : index
    %c0_18 = arith.constant 0 : index
    %c0_19 = arith.constant 0 : index
    %21 = vector.load %arg9[%c0_17, %c0_18, %c0_19] : memref<1x8x32xbf16, #tpu.memory_space<vmem>>, vector<1x8x32xbf16>
    %22 = vector.shape_cast %21 : vector<1x8x32xbf16> to vector<8x32xbf16>
    %23 = vector.shape_cast %20 : vector<8x32xbf16> to vector<1x8x32xbf16>
    tpu.vector_store %arg9[%c0_17, %c0_18, %c0_19], %23 {strides = array<i32>} : memref<1x8x32xbf16, #tpu.memory_space<vmem>>, vector<1x8x32xbf16>,
    %24 = arith.truncf %12 : vector<8x32xf32> to vector<8x32xbf16>
    %c0_20 = arith.constant 0 : index
    %c0_21 = arith.constant 0 : index
    %c0_22 = arith.constant 0 : index
    %25 = vector.load %arg10[%c0_20, %c0_21, %c0_22] : memref<1x8x32xbf16, #tpu.memory_space<vmem>>, vector<1x8x32xbf16>
    %26 = vector.shape_cast %25 : vector<1x8x32xbf16> to vector<8x32xbf16>
    %27 = vector.shape_cast %24 : vector<8x32xbf16> to vector<1x8x32xbf16>
    tpu.vector_store %arg10[%c0_20, %c0_21, %c0_22], %27 {strides = array<i32>} : memref<1x8x32xbf16, #tpu.memory_space<vmem>>, vector<1x8x32xbf16>,
    %28 = arith.truncf %17 : vector<8x32xf32> to vector<8x32xbf16>
    %c0_23 = arith.constant 0 : index
    %c0_24 = arith.constant 0 : index
    %c0_25 = arith.constant 0 : index
    %29 = vector.load %arg11[%c0_23, %c0_24, %c0_25] : memref<1x8x32xbf16, #tpu.memory_space<vmem>>, vector<1x8x32xbf16>
    %30 = vector.shape_cast %29 : vector<1x8x32xbf16> to vector<8x32xbf16>
    %31 = vector.shape_cast %28 : vector<8x32xbf16> to vector<1x8x32xbf16>
    tpu.vector_store %arg11[%c0_23, %c0_24, %c0_25], %31 {strides = array<i32>} : memref<1x8x32xbf16, #tpu.memory_space<vmem>>, vector<1x8x32xbf16>,
    return
  }
  func.func @transform_0(%arg0: i32, %arg1: i32) -> (i32, i32, i32) {
    %c0_i32 = arith.constant 0 : i32
    %c0_i32_0 = arith.constant 0 : i32
    return %arg0, %arg1, %c0_i32 : i32, i32, i32
  }
  func.func @transform_1(%arg0: i32, %arg1: i32) -> (i32, i32) {
    %c0_i32 = arith.constant 0 : i32
    %c0_i32_0 = arith.constant 0 : i32
    %c0_i32_1 = arith.constant 0 : i32
    return %c0_i32, %c0_i32_0 : i32, i32
  }
  func.func @transform_2(%arg0: i32, %arg1: i32) -> (i32, i32) {
    %c0_i32 = arith.constant 0 : i32
    %c0_i32_0 = arith.constant 0 : i32
    %c0_i32_1 = arith.constant 0 : i32
    return %c0_i32, %c0_i32_0 : i32, i32
  }
  func.func @transform_3(%arg0: i32, %arg1: i32) -> (i32, i32) {
    %c0_i32 = arith.constant 0 : i32
    %c0_i32_0 = arith.constant 0 : i32
    %c0_i32_1 = arith.constant 0 : i32
    return %c0_i32, %c0_i32_0 : i32, i32
  }
  func.func @transform_4(%arg0: i32, %arg1: i32) -> (i32, i32) {
    %c0_i32 = arith.constant 0 : i32
    %c0_i32_0 = arith.constant 0 : i32
    %c0_i32_1 = arith.constant 0 : i32
    return %c0_i32, %c0_i32_0 : i32, i32
  }
  func.func @transform_5(%arg0: i32, %arg1: i32) -> (i32, i32) {
    %c0_i32 = arith.constant 0 : i32
    %c0_i32_0 = arith.constant 0 : i32
    %c0_i32_1 = arith.constant 0 : i32
    return %c0_i32, %c0_i32_0 : i32, i32
  }
  func.func @transform_6(%arg0: i32, %arg1: i32) -> (i32, i32) {
    %c0_i32 = arith.constant 0 : i32
    %c0_i32_0 = arith.constant 0 : i32
    %c0_i32_1 = arith.constant 0 : i32
    return %c0_i32, %c0_i32_0 : i32, i32
  }
  func.func @transform_7(%arg0: i32, %arg1: i32) -> (i32, i32, i32) {
    %c0_i32 = arith.constant 0 : i32
    %c0_i32_0 = arith.constant 0 : i32
    return %arg0, %arg1, %c0_i32 : i32, i32, i32
  }
  func.func @transform_8(%arg0: i32, %arg1: i32) -> (i32, i32, i32) {
    %c0_i32 = arith.constant 0 : i32
    %c0_i32_0 = arith.constant 0 : i32
    return %arg0, %arg1, %c0_i32 : i32, i32, i32
  }
  func.func @transform_9(%arg0: i32, %arg1: i32) -> (i32, i32, i32) {
    %c0_i32 = arith.constant 0 : i32
    %c0_i32_0 = arith.constant 0 : i32
    return %arg0, %arg1, %c0_i32 : i32, i32, i32
  }
}

</mosaic_0001>

<llo_original>
// kernel: tpu_custom_call.1
$region0: #{tpu_custom_call.1}
  #allocation0 [shape = 'u32[]', space=smem, size = 0x4, offset = 0x4, fixed_abs, tag = 'smem constant byte address 0x4 - core index']
  #allocation1 [shape = 'u32[144,128]{1,0:T(1,128)}', space=vmem, size = 0x12000, scoped, tag = 'internal scratch']
  %s0 = inlined_call_operand.hbm [shape: f32[2,8,32], index: 0, kind: input, shape index: {}]
  %s1 = inlined_call_operand.hbm [shape: bf16[32,32], index: 1, kind: input, shape index: {}]
  %s2 = inlined_call_operand.vmem [shape: f32[1,32], index: 2, kind: input, shape index: {}]
  %s3 = inlined_call_operand.hbm [shape: bf16[32,32], index: 3, kind: input, shape index: {}]
  %s4 = inlined_call_operand.vmem [shape: f32[1,32], index: 4, kind: input, shape index: {}]
  %s5 = inlined_call_operand.vmem [shape: bf16[32,32], index: 5, kind: input, shape index: {}]
  %s6 = inlined_call_operand.vmem [shape: f32[1,32], index: 6, kind: input, shape index: {}]
  %s7 = inlined_call_operand.hbm [shape: bf16[2,8,32], index: 7, kind: output, shape index: {0}]
  %s8 = inlined_call_operand.hbm [shape: bf16[2,8,32], index: 8, kind: output, shape index: {1}]
  %s9 = inlined_call_operand.hbm [shape: bf16[2,8,32], index: 9, kind: output, shape index: {2}]
  %10 = xla_tuple %s7, %s8, %s9
  %s11 = sld [smem:[#allocation0]]
  $region89: #{tpu_custom_call.1} parent=0
    _
  %s13 = ssub.s32 1, %s11
  %s14 = scalar_select 0, %s13, %s11
  $region1: #{tpu_custom_call.1} parent=0
    #allocation2 [shape = 'u8[8192]{0}', space=vmem, size = 0x2000, scoped, tag = 'input window, operand 0']
    #allocation3 [shape = 's32[2]{0}', space=sflag, size = 0x8, scoped, tag = 'scoped memory for tpu_custom_call.1']
    #allocation4 [shape = 's32[2]{0}', space=sflag, size = 0x8, scoped, tag = 'scoped memory for tpu_custom_call.1']
    #allocation5 [shape = 'u8[8192]{0}', space=vmem, size = 0x2000, scoped, tag = 'input window, operand 1, single buffered']
    #allocation6 [shape = 's32[1]{0}', space=sflag, size = 0x4, scoped, tag = 'scoped memory for tpu_custom_call.1']
    #allocation7 [shape = 'u8[8192]{0}', space=vmem, size = 0x2000, scoped, tag = 'input window, operand 3, single buffered']
    #allocation8 [shape = 'u8[4096]{0}', space=vmem, size = 0x1000, scoped, tag = 'output window, operand 0']
    #allocation9 [shape = 'u8[4096]{0}', space=vmem, size = 0x1000, scoped, tag = 'output window, operand 1']
    #allocation10 [shape = 's32[2]{0}', space=sflag, size = 0x8, scoped, tag = 'scoped memory for tpu_custom_call.1']
    #allocation11 [shape = 'u8[4096]{0}', space=vmem, size = 0x1000, scoped, tag = 'output window, operand 2']
    %15 = vsyncpa [#allocation3], 0
    %s16 = scalar_lea.sflag [#allocation3], 1
    %17 = vsyncpa %s16, 0
    %18 = vsyncpa [#allocation6], 0
    %19 = vsyncpa [#allocation4], 0
    %s20 = scalar_lea.sflag [#allocation4], 1
    %21 = vsyncpa %s20, 0
    %22 = vsyncpa [#allocation10], 0
    %s23 = scalar_lea.sflag [#allocation10], 1
    %24 = vsyncpa %s23, 0
    loop: start=0, step=1, limit=4
    $region2: #{tpu_custom_call.1} parent=1 // loop_pre_header
      _
    $region3: #{tpu_custom_call.1} parent=1 // loop_header
      %s26 = sphi 0, %s30
      %p27 = scmp.ge.s32.totalorder %s26, 4
      %s33 = sphi 0, %s45
      %s34 = sphi 0, %s41
      %s35 = sphi 0, %s33
      %s36 = sphi 0, %s34
      %s37 = sphi 0, %s35
      %s38 = sphi 0, %s36
      %s50 = sphi 0, %s52
      %s53 = sphi 0, %s50
      %s54 = sphi 0, %s53
      %s70 = sphi 0, %s54
      %s74 = sphi 0, %s74
      %s76 = sphi 0, %s74
      %s77 = sphi 0, %s76
      %s91 = sphi 0, %s77
      %s95 = sphi 0, %s95
      %s97 = sphi 0, %s95
      %s98 = sphi 0, %s97
      %s112 = sphi 0, %s98
      %s116 = sphi 0, %s116
      %s118 = sphi 0, %s116
      %s119 = sphi 0, %s118
      %s133 = sphi 0, %s119
      %s137 = sphi 0, %s137
      %s139 = sphi 0, %s137
      %s140 = sphi 0, %s139
      %s154 = sphi 0, %s140
      %s158 = sphi 0, %s158
      %s160 = sphi 0, %s158
      %s161 = sphi 0, %s160
      %s175 = sphi 0, %s161
      %s179 = sphi 0, %s179
      %s181 = sphi 0, %s179
      %s182 = sphi 0, %s181
      %s196 = sphi 0, %s182
      %s204 = sphi 0, %s206
      %s207 = sphi 0, %s204
      %s208 = sphi 0, %s207
      %s224 = sphi 0, %s208
      %s232 = sphi 0, %s234
      %s235 = sphi 0, %s232
      %s236 = sphi 0, %s235
      %s252 = sphi 0, %s236
      %s260 = sphi 0, %s262
      %s263 = sphi 0, %s260
      %s264 = sphi 0, %s263
      %s280 = sphi 0, %s264
    $region4: #{tpu_custom_call.1} parent=1 // loop_header_branch
      %29 = sbr.rel (%p27) target = $region8
    $region5: #{tpu_custom_call.1} parent=1 // loop_body
      %s31 = ssub.s32 %s26, 1
      %s32 = ssub.s32 %s26, 2
      %s39 = sadd.s32 1, %s34
      %p40 = scmp.ge.s32.totalorder %s39, 1
      %s41 = scalar_select %p40, 0, %s39
      %s42 = sadd.s32 1, %s33
      %s43 = scalar_select %p40, %s42, %s33
      %p44 = scmp.ge.s32.totalorder %s43, 2
      %s45 = scalar_select %p44, 0, %s43
      %s46 = ssub.s32 %s33, %s45
      %s47 = ssub.s32 %s34, %s41
      %s48 = sor.u32 %s46, %s47
      %p49 = scmp.eq.s32.totalorder %s48, 0
      %s51 = sadd.s32 %s50, 1
      %s52 = scalar_select %p49, %s50, %s51
      %p55 = pneg %p49
      %p56 = scmp.eq.s32.totalorder %s26, 1
      %p57 = por %p55, %p56
      %p58 = scmp.ne.s32.totalorder %s50, %s53
      %p59 = scmp.eq.s32.totalorder %s26, 0
      %p60 = por %p58, %p59
      %p61 = scmp.ne.s32.totalorder %s50, %s53
      %p62 = scmp.eq.s32.totalorder %s31, 1
      %p63 = por %p61, %p62
      %p64 = scmp.ne.s32.totalorder %s53, %s54
      %p65 = scmp.eq.s32.totalorder %s31, 0
      %p66 = por %p64, %p65
      %p67 = scmp.ne.s32.totalorder %s53, %s54
      %p68 = scmp.eq.s32.totalorder %s32, 1
      %p69 = por %p67, %p68
      %p71 = scmp.ne.s32.totalorder %s54, %s70
      %p72 = scmp.eq.s32.totalorder %s32, 0
      %p73 = por %p71, %p72
      %s75 = sadd.s32 %s74, 1
      %p78 = scmp.eq.s32.totalorder %s26, 1
      %p79 = scmp.ne.s32.totalorder %s74, %s76
      %p80 = scmp.eq.s32.totalorder %s26, 0
      %p81 = por %p79, %p80
      %p82 = scmp.ne.s32.totalorder %s74, %s76
      %p83 = scmp.eq.s32.totalorder %s31, 1
      %p84 = por %p82, %p83
      %p85 = scmp.ne.s32.totalorder %s76, %s77
      %p86 = scmp.eq.s32.totalorder %s31, 0
      %p87 = por %p85, %p86
      %p88 = scmp.ne.s32.totalorder %s76, %s77
      %p89 = scmp.eq.s32.totalorder %s32, 1
      %p90 = por %p88, %p89
      %p92 = scmp.ne.s32.totalorder %s77, %s91
      %p93 = scmp.eq.s32.totalorder %s32, 0
      %p94 = por %p92, %p93
      %s96 = sadd.s32 %s95, 1
      %p99 = scmp.eq.s32.totalorder %s26, 1
      %p100 = scmp.ne.s32.totalorder %s95, %s97
      %p101 = scmp.eq.s32.totalorder %s26, 0
      %p102 = por %p100, %p101
      %p103 = scmp.ne.s32.totalorder %s95, %s97
      %p104 = scmp.eq.s32.totalorder %s31, 1
      %p105 = por %p103, %p104
      %p106 = scmp.ne.s32.totalorder %s97, %s98
      %p107 = scmp.eq.s32.totalorder %s31, 0
      %p108 = por %p106, %p107
      %p109 = scmp.ne.s32.totalorder %s97, %s98
      %p110 = scmp.eq.s32.totalorder %s32, 1
      %p111 = por %p109, %p110
      %p113 = scmp.ne.s32.totalorder %s98, %s112
      %p114 = scmp.eq.s32.totalorder %s32, 0
      %p115 = por %p113, %p114
      %s117 = sadd.s32 %s116, 1
      %p120 = scmp.eq.s32.totalorder %s26, 1
      %p121 = scmp.ne.s32.totalorder %s116, %s118
      %p122 = scmp.eq.s32.totalorder %s26, 0
      %p123 = por %p121, %p122
      %p124 = scmp.ne.s32.totalorder %s116, %s118
      %p125 = scmp.eq.s32.totalorder %s31, 1
      %p126 = por %p124, %p125
      %p127 = scmp.ne.s32.totalorder %s118, %s119
      %p128 = scmp.eq.s32.totalorder %s31, 0
      %p129 = por %p127, %p128
      %p130 = scmp.ne.s32.totalorder %s118, %s119
      %p131 = scmp.eq.s32.totalorder %s32, 1
      %p132 = por %p130, %p131
      %p134 = scmp.ne.s32.totalorder %s119, %s133
      %p135 = scmp.eq.s32.totalorder %s32, 0
      %p136 = por %p134, %p135
      %s138 = sadd.s32 %s137, 1
      %p141 = scmp.eq.s32.totalorder %s26, 1
      %p142 = scmp.ne.s32.totalorder %s137, %s139
      %p143 = scmp.eq.s32.totalorder %s26, 0
      %p144 = por %p142, %p143
      %p145 = scmp.ne.s32.totalorder %s137, %s139
      %p146 = scmp.eq.s32.totalorder %s31, 1
      %p147 = por %p145, %p146
      %p148 = scmp.ne.s32.totalorder %s139, %s140
      %p149 = scmp.eq.s32.totalorder %s31, 0
      %p150 = por %p148, %p149
      %p151 = scmp.ne.s32.totalorder %s139, %s140
      %p152 = scmp.eq.s32.totalorder %s32, 1
      %p153 = por %p151, %p152
      %p155 = scmp.ne.s32.totalorder %s140, %s154
      %p156 = scmp.eq.s32.totalorder %s32, 0
      %p157 = por %p155, %p156
      %s159 = sadd.s32 %s158, 1
      %p162 = scmp.eq.s32.totalorder %s26, 1
      %p163 = scmp.ne.s32.totalorder %s158, %s160
      %p164 = scmp.eq.s32.totalorder %s26, 0
      %p165 = por %p163, %p164
      %p166 = scmp.ne.s32.totalorder %s158, %s160
      %p167 = scmp.eq.s32.totalorder %s31, 1
      %p168 = por %p166, %p167
      %p169 = scmp.ne.s32.totalorder %s160, %s161
      %p170 = scmp.eq.s32.totalorder %s31, 0
      %p171 = por %p169, %p170
      %p172 = scmp.ne.s32.totalorder %s160, %s161
      %p173 = scmp.eq.s32.totalorder %s32, 1
      %p174 = por %p172, %p173
      %p176 = scmp.ne.s32.totalorder %s161, %s175
      %p177 = scmp.eq.s32.totalorder %s32, 0
      %p178 = por %p176, %p177
      %s180 = sadd.s32 %s179, 1
      %p183 = scmp.eq.s32.totalorder %s26, 1
      %p184 = scmp.ne.s32.totalorder %s179, %s181
      %p185 = scmp.eq.s32.totalorder %s26, 0
      %p186 = por %p184, %p185
      %p187 = scmp.ne.s32.totalorder %s179, %s181
      %p188 = scmp.eq.s32.totalorder %s31, 1
      %p189 = por %p187, %p188
      %p190 = scmp.ne.s32.totalorder %s181, %s182
      %p191 = scmp.eq.s32.totalorder %s31, 0
      %p192 = por %p190, %p191
      %p193 = scmp.ne.s32.totalorder %s181, %s182
      %p194 = scmp.eq.s32.totalorder %s32, 1
      %p195 = por %p193, %p194
      %p197 = scmp.ne.s32.totalorder %s182, %s196
      %p198 = scmp.eq.s32.totalorder %s32, 0
      %p199 = por %p197, %p198
      %s200 = ssub.s32 %s33, %s45
      %s201 = ssub.s32 %s34, %s41
      %s202 = sor.u32 %s200, %s201
      %p203 = scmp.eq.s32.totalorder %s202, 0
      %s205 = sadd.s32 %s204, 1
      %s206 = scalar_select %p203, %s204, %s205
      %p209 = pneg %p203
      %p210 = scmp.eq.s32.totalorder %s26, 1
      %p211 = por %p209, %p210
      %p212 = scmp.ne.s32.totalorder %s204, %s207
      %p213 = scmp.eq.s32.totalorder %s26, 0
      %p214 = por %p212, %p213
      %p215 = scmp.ne.s32.totalorder %s204, %s207
      %p216 = scmp.eq.s32.totalorder %s31, 1
      %p217 = por %p215, %p216
      %p218 = scmp.ne.s32.totalorder %s207, %s208
      %p219 = scmp.eq.s32.totalorder %s31, 0
      %p220 = por %p218, %p219
      %p221 = scmp.ne.s32.totalorder %s207, %s208
      %p222 = scmp.eq.s32.totalorder %s32, 1
      %p223 = por %p221, %p222
      %p225 = scmp.ne.s32.totalorder %s208, %s224
      %p226 = scmp.eq.s32.totalorder %s32, 0
      %p227 = por %p225, %p226
      %s228 = ssub.s32 %s33, %s45
      %s229 = ssub.s32 %s34, %s41
      %s230 = sor.u32 %s228, %s229
      %p231 = scmp.eq.s32.totalorder %s230, 0
      %s233 = sadd.s32 %s232, 1
      %s234 = scalar_select %p231, %s232, %s233
      %p237 = pneg %p231
      %p238 = scmp.eq.s32.totalorder %s26, 1
      %p239 = por %p237, %p238
      %p240 = scmp.ne.s32.totalorder %s232, %s235
      %p241 = scmp.eq.s32.totalorder %s26, 0
      %p242 = por %p240, %p241
      %p243 = scmp.ne.s32.totalorder %s232, %s235
      %p244 = scmp.eq.s32.totalorder %s31, 1
      %p245 = por %p243, %p244
      %p246 = scmp.ne.s32.totalorder %s235, %s236
      %p247 = scmp.eq.s32.totalorder %s31, 0
      %p248 = por %p246, %p247
      %p249 = scmp.ne.s32.totalorder %s235, %s236
      %p250 = scmp.eq.s32.totalorder %s32, 1
      %p251 = por %p249, %p250
      %p253 = scmp.ne.s32.totalorder %s236, %s252
      %p254 = scmp.eq.s32.totalorder %s32, 0
      %p255 = por %p253, %p254
      %s256 = ssub.s32 %s33, %s45
      %s257 = ssub.s32 %s34, %s41
      %s258 = sor.u32 %s256, %s257
      %p259 = scmp.eq.s32.totalorder %s258, 0
      %s261 = sadd.s32 %s260, 1
      %s262 = scalar_select %p259, %s260, %s261
      %p265 = pneg %p259
      %p266 = scmp.eq.s32.totalorder %s26, 1
      %p267 = por %p265, %p266
      %p268 = scmp.ne.s32.totalorder %s260, %s263
      %p269 = scmp.eq.s32.totalorder %s26, 0
      %p270 = por %p268, %p269
      %p271 = scmp.ne.s32.totalorder %s260, %s263
      %p272 = scmp.eq.s32.totalorder %s31, 1
      %p273 = por %p271, %p272
      %p274 = scmp.ne.s32.totalorder %s263, %s264
      %p275 = scmp.eq.s32.totalorder %s31, 0
      %p276 = por %p274, %p275
      %p277 = scmp.ne.s32.totalorder %s263, %s264
      %p278 = scmp.eq.s32.totalorder %s32, 1
      %p279 = por %p277, %p278
      %p281 = scmp.ne.s32.totalorder %s264, %s280
      %p282 = scmp.eq.s32.totalorder %s32, 0
      %p283 = por %p281, %p282
      %p284 = scmp.le.s32.totalorder 1, %s26
      %p285 = scmp.lt.s32.totalorder %s26, 3
      %p286 = pnand %p284, %p285
      %p287 = pneg %p286
      // Predicated region
      $region9: #{tpu_custom_call.1} parent=5 // pred_check
        _
      $region10: #{tpu_custom_call.1} parent=5 // pred_check_branch
        %289 = sbr.rel (%p286) target = $region12
      $region11: #{tpu_custom_call.1} parent=5 // pred_region
        %s290 = ssub.s32 %s26, 1
        // Predicated region
        $region13: #{tpu_custom_call.1} parent=11 // pred_check
          %p291 = pneg %p87
        $region14: #{tpu_custom_call.1} parent=11 // pred_check_branch
          %293 = sbr.rel (%p291) target = $region16
        $region15: #{tpu_custom_call.1} parent=11 // pred_region
          %s295 = ssub.s32 256, 256
          %296 = vsyncadd [#allocation6], %s295
          %s297 = sshll.u32 [#allocation5], 4
          %s298 = int_to_ptr.vmem [resolvable:$true] %s297
          %303 = dma.hbm_to_vmem [thread:$0]  %s1, 256, %s298, [#allocation6], 64, 64, 4
        $region16: #{tpu_custom_call.1} parent=11 // pred_fallthru
          _
        // Predicated region
        $region17: #{tpu_custom_call.1} parent=11 // pred_check
          %p304 = pneg %p108
        $region18: #{tpu_custom_call.1} parent=11 // pred_check_branch
          %306 = sbr.rel (%p304) target = $region20
        $region19: #{tpu_custom_call.1} parent=11 // pred_region
          _
        $region20: #{tpu_custom_call.1} parent=11 // pred_fallthru
          _
        // Predicated region
        $region21: #{tpu_custom_call.1} parent=11 // pred_check
          %p307 = pneg %p129
        $region22: #{tpu_custom_call.1} parent=11 // pred_check_branch
          %309 = sbr.rel (%p307) target = $region24
        $region23: #{tpu_custom_call.1} parent=11 // pred_region
          %s311 = ssub.s32 256, 256
          %312 = vsyncadd [#allocation6], %s311
          %s313 = sshll.u32 [#allocation7], 4
          %s314 = int_to_ptr.vmem [resolvable:$true] %s313
          %319 = dma.hbm_to_vmem [thread:$0]  %s3, 256, %s314, [#allocation6], 64, 64, 4
        $region24: #{tpu_custom_call.1} parent=11 // pred_fallthru
          _
        // Predicated region
        $region25: #{tpu_custom_call.1} parent=11 // pred_check
          %p320 = pneg %p150
        $region26: #{tpu_custom_call.1} parent=11 // pred_check_branch
          %322 = sbr.rel (%p320) target = $region28
        $region27: #{tpu_custom_call.1} parent=11 // pred_region
          _
        $region28: #{tpu_custom_call.1} parent=11 // pred_fallthru
          _
        // Predicated region
        $region29: #{tpu_custom_call.1} parent=11 // pred_check
          %p323 = pneg %p171
        $region30: #{tpu_custom_call.1} parent=11 // pred_check_branch
          %325 = sbr.rel (%p323) target = $region32
        $region31: #{tpu_custom_call.1} parent=11 // pred_region
          _
        $region32: #{tpu_custom_call.1} parent=11 // pred_fallthru
          _
        // Predicated region
        $region33: #{tpu_custom_call.1} parent=11 // pred_check
          %p326 = pneg %p192
        $region34: #{tpu_custom_call.1} parent=11 // pred_check_branch
          %328 = sbr.rel (%p326) target = $region36
        $region35: #{tpu_custom_call.1} parent=11 // pred_region
          _
        $region36: #{tpu_custom_call.1} parent=11 // pred_fallthru
          _
      $region12: #{tpu_custom_call.1} parent=5 // pred_fallthru
        _
      %p329 = scmp.lt.s32.totalorder %s26, 2
      // Predicated region
      $region37: #{tpu_custom_call.1} parent=5 // pred_check
        %p330 = pneg %p329
      $region38: #{tpu_custom_call.1} parent=5 // pred_check_branch
        %332 = sbr.rel (%p330) target = $region40
      $region39: #{tpu_custom_call.1} parent=5 // pred_region
        // Predicated region
        $region41: #{tpu_custom_call.1} parent=39 // pred_check
          %p333 = pneg %p60
        $region42: #{tpu_custom_call.1} parent=39 // pred_check_branch
          %335 = sbr.rel (%p333) target = $region44
        $region43: #{tpu_custom_call.1} parent=39 // pred_region
          %s336 = sand.u32 %s50, 1
          %s337 = scalar_lea.sflag [#allocation3], %s336
          %s338 = sand.u32 %s50, 1
          %s339 = smul.addr %s338, 8
          %s340 = scalar_lea.vmem [#allocation2], %s339
          %s342 = ssub.s32 128, 128
          %343 = vsyncadd %s337, %s342
          %s344 = sadd.s32 %s34, %s33
          %s345 = smul.addr %s344, 128
          %s346 = scalar_lea.hbm %s0, %s345
          %s348 = sshll.u32 %s340, 4
          %s349 = int_to_ptr.vmem [resolvable:$true] %s348
          %351 = dma.hbm_to_vmem [thread:$0]  %s346, 128, %s349, %s337
        $region44: #{tpu_custom_call.1} parent=39 // pred_fallthru
          _
      $region40: #{tpu_custom_call.1} parent=5 // pred_fallthru
        _
      %p352 = scmp.le.s32.totalorder 1, %s26
      %p353 = scmp.lt.s32.totalorder %s26, 3
      %p354 = pnand %p352, %p353
      %p355 = pneg %p354
      // Predicated region
      $region45: #{tpu_custom_call.1} parent=5 // pred_check
        _
      $region46: #{tpu_custom_call.1} parent=5 // pred_check_branch
        %357 = sbr.rel (%p354) target = $region48
      $region47: #{tpu_custom_call.1} parent=5 // pred_region
        %s358 = ssub.s32 %s26, 1
        %s359 = sand.u32 %s53, 1
        %s360 = scalar_lea.sflag [#allocation3], %s359
        %s361 = sand.u32 %s53, 1
        %s362 = smul.addr %s361, 8
        %s363 = scalar_lea.vmem [#allocation2], %s362
        // Predicated region
        $region49: #{tpu_custom_call.1} parent=47 // pred_check
          %p364 = pneg %p66
        $region50: #{tpu_custom_call.1} parent=47 // pred_check_branch
          %366 = sbr.rel (%p364) target = $region52
        $region51: #{tpu_custom_call.1} parent=47 // pred_region
          %367 = dma.done %s360, 128
        $region52: #{tpu_custom_call.1} parent=47 // pred_fallthru
          _
        // Predicated region
        $region53: #{tpu_custom_call.1} parent=47 // pred_check
          %p368 = pneg %p87
        $region54: #{tpu_custom_call.1} parent=47 // pred_check_branch
          %370 = sbr.rel (%p368) target = $region56
        $region55: #{tpu_custom_call.1} parent=47 // pred_region
          %371 = dma.done [#allocation6], 256
        $region56: #{tpu_custom_call.1} parent=47 // pred_fallthru
          _
        // Predicated region
        $region57: #{tpu_custom_call.1} parent=47 // pred_check
          %p372 = pneg %p129
        $region58: #{tpu_custom_call.1} parent=47 // pred_check_branch
          %374 = sbr.rel (%p372) target = $region60
        $region59: #{tpu_custom_call.1} parent=47 // pred_region
          %375 = dma.done [#allocation6], 256
        $region60: #{tpu_custom_call.1} parent=47 // pred_fallthru
          _
        %s376 = sand.u32 %s53, 1
        %s377 = scalar_lea.sflag [#allocation3], %s376
        %s378 = sand.u32 %s53, 1
        %s379 = smul.addr %s378, 8
        %s380 = scalar_lea.vmem [#allocation2], %s379
        %p381 = pneg %p66
        %p382 = pneg %p63
        %p383 = pneg %p87
        %p384 = pneg %p84
        %p385 = pneg %p108
        %p386 = pneg %p105
        %p387 = pneg %p129
        %p388 = pneg %p126
        %p389 = pneg %p150
        %p390 = pneg %p147
        %p391 = pneg %p171
        %p392 = pneg %p168
        %p393 = pneg %p192
        %p394 = pneg %p189
        %p395 = pneg %p220
        %p396 = pneg %p217
        %s397 = sand.u32 %s207, 1
        %s398 = scalar_lea.sflag [#allocation4], %s397
        %s399 = sand.u32 %s207, 1
        %s400 = smul.addr %s399, 4
        %s401 = scalar_lea.vmem [#allocation8], %s400
        %p402 = pneg %p248
        %p403 = pneg %p245
        %s404 = sand.u32 %s31, 1
        %s405 = scalar_lea.sflag [#allocation10], %s404
        %s406 = sand.u32 %s235, 1
        %s407 = smul.addr %s406, 4
        %s408 = scalar_lea.vmem [#allocation9], %s407
        %p409 = pneg %p276
        %p410 = pneg %p273
        %s411 = sand.u32 %s31, 1
        %s412 = scalar_lea.sflag [#allocation10], %s411
        %s413 = sand.u32 %s263, 1
        %s414 = smul.addr %s413, 4
        %s415 = scalar_lea.vmem [#allocation11], %s414
        %v417 = vld [vmem:[%s363] sm:$0xff]
        %v418 = vpack.c.bf16 %v417, %v417
        %v419 = vld [vmem:[#allocation5] sm:$0xf]
        %v420 = vld [vmem:[#allocation5 + $0x4] sm:$0xf]
        %v421 = vld [vmem:[#allocation5 + $0x8] sm:$0xf]
        %v422 = vld [vmem:[#allocation5 + $0xc] sm:$0xf]
        %v423 = vld [vmem:[%s2] sm:$0x1]
        %v425 = vlaneseq
        %v426 = vshrl.u32 %v425, 7
        %v427 = vsub.s32 0, %v426
        %v428 = vrot.slane %v423, %v427
        %v434 = vunpack.c.l.b16 %v419
        %v435 = vunpack.c.l.b16 %v420
        %v436 = vunpack.c.l.b16 %v421
        %v437 = vunpack.c.l.b16 %v422
        %v438 = vpack.c.b16 %v435, %v434
        %v439 = vpack.c.b16 %v437, %v436
        %vm442 = vcmask 261120
        %v444 = vsel %vm442, %v418, 0
        %446 = vmatprep.subr.bf16.mxu0 0
        %447 = vmatpush1.bf16.msra.mxu0 %v438
        %448 = vmatprep.subr.bf16.mxu0 0
        %449 = vmatpush1.bf16.msra.mxu0 %v439
        %450 = vmatprep.subr.bf16.mxu0 0
        %451 = vmatpush1.bf16.msra.mxu0 0
        %452 = vmatprep.subr.bf16.mxu0 0
        %453 = vmatpush1.bf16.msra.mxu0 0
        %454 = vmatprep.subr.bf16.mxu0 0
        %455 = vmatpush1.bf16.msra.mxu0 0
        %456 = vmatprep.subr.bf16.mxu0 0
        %457 = vmatpush1.bf16.msra.mxu0 0
        %458 = vmatprep.subr.bf16.mxu0 0
        %459 = vmatpush1.bf16.msra.mxu0 0
        %460 = vmatprep.subr.bf16.mxu0 0
        %461 = vmatpush1.bf16.msra.mxu0 0
        %462 = vmatprep.subr.bf16.mxu0 0
        %463 = vmatpush1.bf16.msra.mxu0 0
        %464 = vmatprep.subr.bf16.mxu0 0
        %465 = vmatpush1.bf16.msra.mxu0 0
        %466 = vmatprep.subr.bf16.mxu0 0
        %467 = vmatpush1.bf16.msra.mxu0 0
        %468 = vmatprep.subr.bf16.mxu0 0
        %469 = vmatpush1.bf16.msra.mxu0 0
        %470 = vmatprep.subr.bf16.mxu0 0
        %471 = vmatpush1.bf16.msra.mxu0 0
        %472 = vmatprep.subr.bf16.mxu0 0
        %473 = vmatpush1.bf16.msra.mxu0 0
        %474 = vmatprep.subr.bf16.mxu0 0
        %475 = vmatpush1.bf16.msra.mxu0 0
        %476 = vmatprep.subr.bf16.mxu0 0
        %477 = vmatpush1.bf16.msra.mxu0 0
        %478 = vmatprep.mubr.bf16.mxu0 0
        %479 = vmatmul.mubr.bf16.gmra.mrb[0].mxu0 %v444
        %v480 = vpop.f32.mrb[0].mxu0
        %v481 = vadd.f32 %v428, %v480
        %v482 = vpop.f32.mrb[0].mxu0
        %v483 = vpop.f32.mrb[0].mxu0
        %v484 = vpop.f32.mrb[0].mxu0
        %485 = vdwg.mxu0
        %v486 = vld [vmem:[#allocation7] sm:$0xf]
        %v487 = vld [vmem:[#allocation7 + $0x4] sm:$0xf]
        %v488 = vld [vmem:[#allocation7 + $0x8] sm:$0xf]
        %v489 = vld [vmem:[#allocation7 + $0xc] sm:$0xf]
        %v490 = vld [vmem:[%s4] sm:$0x1]
        %v492 = vlaneseq
        %v493 = vshrl.u32 %v492, 7
        %v494 = vsub.s32 0, %v493
        %v495 = vrot.slane %v490, %v494
        %v501 = vunpack.c.l.b16 %v486
        %v502 = vunpack.c.l.b16 %v487
        %v503 = vunpack.c.l.b16 %v488
        %v504 = vunpack.c.l.b16 %v489
        %v505 = vpack.c.b16 %v502, %v501
        %v506 = vpack.c.b16 %v504, %v503
        %509 = vmatprep.subr.bf16.mxu0 0
        %510 = vmatpush1.bf16.msra.mxu0 %v505
        %511 = vmatprep.subr.bf16.mxu0 0
        %512 = vmatpush1.bf16.msra.mxu0 %v506
        %513 = vmatprep.subr.bf16.mxu0 0
        %514 = vmatpush1.bf16.msra.mxu0 0
        %515 = vmatprep.subr.bf16.mxu0 0
        %516 = vmatpush1.bf16.msra.mxu0 0
        %517 = vmatprep.subr.bf16.mxu0 0
        %518 = vmatpush1.bf16.msra.mxu0 0
        %519 = vmatprep.subr.bf16.mxu0 0
        %520 = vmatpush1.bf16.msra.mxu0 0
        %521 = vmatprep.subr.bf16.mxu0 0
        %522 = vmatpush1.bf16.msra.mxu0 0
        %523 = vmatprep.subr.bf16.mxu0 0
        %524 = vmatpush1.bf16.msra.mxu0 0
        %525 = vmatprep.subr.bf16.mxu0 0
        %526 = vmatpush1.bf16.msra.mxu0 0
        %527 = vmatprep.subr.bf16.mxu0 0
        %528 = vmatpush1.bf16.msra.mxu0 0
        %529 = vmatprep.subr.bf16.mxu0 0
        %530 = vmatpush1.bf16.msra.mxu0 0
        %531 = vmatprep.subr.bf16.mxu0 0
        %532 = vmatpush1.bf16.msra.mxu0 0
        %533 = vmatprep.subr.bf16.mxu0 0
        %534 = vmatpush1.bf16.msra.mxu0 0
        %535 = vmatprep.subr.bf16.mxu0 0
        %536 = vmatpush1.bf16.msra.mxu0 0
        %537 = vmatprep.subr.bf16.mxu0 0
        %538 = vmatpush1.bf16.msra.mxu0 0
        %539 = vmatprep.subr.bf16.mxu0 0
        %540 = vmatpush1.bf16.msra.mxu0 0
        %541 = vmatprep.mubr.bf16.mxu0 0
        %542 = vmatmul.mubr.bf16.gmra.mrb[0].mxu0 %v444
        %v543 = vpop.f32.mrb[0].mxu0
        %v544 = vadd.f32 %v495, %v543
        %v545 = vpop.f32.mrb[0].mxu0
        %v546 = vpop.f32.mrb[0].mxu0
        %v547 = vpop.f32.mrb[0].mxu0
        %548 = vdwg.mxu0
        %v549 = vld [vmem:[%s5] sm:$0xf]
        %v550 = vld [vmem:[%s5 + $0x4] sm:$0xf]
        %v551 = vld [vmem:[%s5 + $0x8] sm:$0xf]
        %v552 = vld [vmem:[%s5 + $0xc] sm:$0xf]
        %v553 = vld [vmem:[%s6] sm:$0x1]
        %v555 = vlaneseq
        %v556 = vshrl.u32 %v555, 7
        %v557 = vsub.s32 0, %v556
        %v558 = vrot.slane %v553, %v557
        %v564 = vunpack.c.l.b16 %v549
        %v565 = vunpack.c.l.b16 %v550
        %v566 = vunpack.c.l.b16 %v551
        %v567 = vunpack.c.l.b16 %v552
        %v568 = vpack.c.b16 %v565, %v564
        %v569 = vpack.c.b16 %v567, %v566
        %572 = vmatprep.subr.bf16.mxu0 0
        %573 = vmatpush1.bf16.msra.mxu0 %v568
        %574 = vmatprep.subr.bf16.mxu0 0
        %575 = vmatpush1.bf16.msra.mxu0 %v569
        %576 = vmatprep.subr.bf16.mxu0 0
        %577 = vmatpush1.bf16.msra.mxu0 0
        %578 = vmatprep.subr.bf16.mxu0 0
        %579 = vmatpush1.bf16.msra.mxu0 0
        %580 = vmatprep.subr.bf16.mxu0 0
        %581 = vmatpush1.bf16.msra.mxu0 0
        %582 = vmatprep.subr.bf16.mxu0 0
        %583 = vmatpush1.bf16.msra.mxu0 0
        %584 = vmatprep.subr.bf16.mxu0 0
        %585 = vmatpush1.bf16.msra.mxu0 0
        %586 = vmatprep.subr.bf16.mxu0 0
        %587 = vmatpush1.bf16.msra.mxu0 0
        %588 = vmatprep.subr.bf16.mxu0 0
        %589 = vmatpush1.bf16.msra.mxu0 0
        %590 = vmatprep.subr.bf16.mxu0 0
        %591 = vmatpush1.bf16.msra.mxu0 0
        %592 = vmatprep.subr.bf16.mxu0 0
        %593 = vmatpush1.bf16.msra.mxu0 0
        %594 = vmatprep.subr.bf16.mxu0 0
        %595 = vmatpush1.bf16.msra.mxu0 0
        %596 = vmatprep.subr.bf16.mxu0 0
        %597 = vmatpush1.bf16.msra.mxu0 0
        %598 = vmatprep.subr.bf16.mxu0 0
        %599 = vmatpush1.bf16.msra.mxu0 0
        %600 = vmatprep.subr.bf16.mxu0 0
        %601 = vmatpush1.bf16.msra.mxu0 0
        %602 = vmatprep.subr.bf16.mxu0 0
        %603 = vmatpush1.bf16.msra.mxu0 0
        %604 = vmatprep.mubr.bf16.mxu0 0
        %605 = vmatmul.mubr.bf16.gmra.mrb[0].mxu0 %v444
        %v606 = vpop.f32.mrb[0].mxu0
        %v607 = vadd.f32 %v558, %v606
        %v608 = vpop.f32.mrb[0].mxu0
        %v609 = vpop.f32.mrb[0].mxu0
        %v610 = vpop.f32.mrb[0].mxu0
        %611 = vdwg.mxu0
        %v612 = vmul.f32 %v481, 0.17677669
        %v613 = vpack.c.bf16 %v612, %v612
        %vm614 = vcmask 257024
        %615 = vst.msk [vmem:[%s401] sm:$0xf] %vm614, %v613
        %v616 = vpack.c.bf16 %v544, %v544
        %617 = vst.msk [vmem:[%s408] sm:$0xf] %vm614, %v616
        %v618 = vpack.c.bf16 %v607, %v607
        %619 = vst.msk [vmem:[%s415] sm:$0xf] %vm614, %v618
        %s620 = sand.u32 %s207, 1
        %s621 = scalar_lea.sflag [#allocation4], %s620
        %s622 = sand.u32 %s207, 1
        %s623 = smul.addr %s622, 4
        %s624 = scalar_lea.vmem [#allocation8], %s623
        %s625 = sand.u32 %s31, 1
        %s626 = scalar_lea.sflag [#allocation10], %s625
        %s627 = sand.u32 %s235, 1
        %s628 = smul.addr %s627, 4
        %s629 = scalar_lea.vmem [#allocation9], %s628
        %s630 = sand.u32 %s31, 1
        %s631 = scalar_lea.sflag [#allocation10], %s630
        %s632 = sand.u32 %s263, 1
        %s633 = smul.addr %s632, 4
        %s634 = scalar_lea.vmem [#allocation11], %s633
        // Predicated region
        $region61: #{tpu_custom_call.1} parent=47 // pred_check
          %p635 = pneg %p217
        $region62: #{tpu_custom_call.1} parent=47 // pred_check_branch
          %637 = sbr.rel (%p635) target = $region64
        $region63: #{tpu_custom_call.1} parent=47 // pred_region
          %s639 = ssub.s32 64, 64
          %640 = vsyncadd %s621, %s639
          %s641 = sadd.s32 %s36, %s35
          %s642 = smul.addr %s641, 64
          %s643 = scalar_lea.hbm %s7, %s642
          %s645 = sshll.u32 %s624, 4
          %s646 = int_to_ptr.vmem [resolvable:$true] %s645
          %648 = dma.vmem_to_hbm [thread:$0]  %s646, 64, %s643, %s621
        $region64: #{tpu_custom_call.1} parent=47 // pred_fallthru
          _
        // Predicated region
        $region65: #{tpu_custom_call.1} parent=47 // pred_check
          %p649 = pneg %p245
        $region66: #{tpu_custom_call.1} parent=47 // pred_check_branch
          %651 = sbr.rel (%p649) target = $region68
        $region67: #{tpu_custom_call.1} parent=47 // pred_region
          %s653 = ssub.s32 64, 64
          %654 = vsyncadd %s626, %s653
          %s655 = sadd.s32 %s36, %s35
          %s656 = smul.addr %s655, 64
          %s657 = scalar_lea.hbm %s8, %s656
          %s659 = sshll.u32 %s629, 4
          %s660 = int_to_ptr.vmem [resolvable:$true] %s659
          %662 = dma.vmem_to_hbm [thread:$0]  %s660, 64, %s657, %s626
        $region68: #{tpu_custom_call.1} parent=47 // pred_fallthru
          _
        // Predicated region
        $region69: #{tpu_custom_call.1} parent=47 // pred_check
          %p663 = pneg %p273
        $region70: #{tpu_custom_call.1} parent=47 // pred_check_branch
          %665 = sbr.rel (%p663) target = $region72
        $region71: #{tpu_custom_call.1} parent=47 // pred_region
          %s667 = ssub.s32 64, 64
          %668 = vsyncadd %s631, %s667
          %s669 = sadd.s32 %s36, %s35
          %s670 = smul.addr %s669, 64
          %s671 = scalar_lea.hbm %s9, %s670
          %s673 = sshll.u32 %s634, 4
          %s674 = int_to_ptr.vmem [resolvable:$true] %s673
          %676 = dma.vmem_to_hbm [thread:$0]  %s674, 64, %s671, %s631
        $region72: #{tpu_custom_call.1} parent=47 // pred_fallthru
          _
      $region48: #{tpu_custom_call.1} parent=5 // pred_fallthru
        _
      %p677 = scmp.le.s32.totalorder 2, %s26
      // Predicated region
      $region73: #{tpu_custom_call.1} parent=5 // pred_check
        %p678 = pneg %p677
      $region74: #{tpu_custom_call.1} parent=5 // pred_check_branch
        %680 = sbr.rel (%p678) target = $region76
      $region75: #{tpu_custom_call.1} parent=5 // pred_region
        %s681 = ssub.s32 %s26, 2
        // Predicated region
        $region77: #{tpu_custom_call.1} parent=75 // pred_check
          %p682 = pneg %p223
        $region78: #{tpu_custom_call.1} parent=75 // pred_check_branch
          %684 = sbr.rel (%p682) target = $region80
        $region79: #{tpu_custom_call.1} parent=75 // pred_region
          %s685 = sand.u32 %s208, 1
          %s686 = scalar_lea.sflag [#allocation4], %s685
          %s687 = sand.u32 %s208, 1
          %s688 = smul.addr %s687, 4
          %s689 = scalar_lea.vmem [#allocation8], %s688
          %690 = dma.done %s686, 64
        $region80: #{tpu_custom_call.1} parent=75 // pred_fallthru
          _
        // Predicated region
        $region81: #{tpu_custom_call.1} parent=75 // pred_check
          %p691 = pneg %p251
        $region82: #{tpu_custom_call.1} parent=75 // pred_check_branch
          %693 = sbr.rel (%p691) target = $region84
        $region83: #{tpu_custom_call.1} parent=75 // pred_region
          %s694 = sand.u32 %s32, 1
          %s695 = scalar_lea.sflag [#allocation10], %s694
          %s696 = sand.u32 %s236, 1
          %s697 = smul.addr %s696, 4
          %s698 = scalar_lea.vmem [#allocation9], %s697
          %699 = dma.done %s695, 64
        $region84: #{tpu_custom_call.1} parent=75 // pred_fallthru
          _
        // Predicated region
        $region85: #{tpu_custom_call.1} parent=75 // pred_check
          %p700 = pneg %p279
        $region86: #{tpu_custom_call.1} parent=75 // pred_check_branch
          %702 = sbr.rel (%p700) target = $region88
        $region87: #{tpu_custom_call.1} parent=75 // pred_region
          %s703 = sand.u32 %s32, 1
          %s704 = scalar_lea.sflag [#allocation10], %s703
          %s705 = sand.u32 %s264, 1
          %s706 = smul.addr %s705, 4
          %s707 = scalar_lea.vmem [#allocation11], %s706
          %708 = dma.done %s704, 64
        $region88: #{tpu_custom_call.1} parent=75 // pred_fallthru
          _
      $region76: #{tpu_custom_call.1} parent=5 // pred_fallthru
        _
    $region6: #{tpu_custom_call.1} parent=1 // loop_footer
      %s30 = sadd.s32 1, %s26
    $region7: #{tpu_custom_call.1} parent=1 // loop_footer_branch
      %25 = sbr.rel target = $region3
    $region8: #{tpu_custom_call.1} parent=1 // loop_exit
      _
    %709 = vsyncpa [#allocation3], 1
    %s710 = scalar_lea.sflag [#allocation3], 1
    %711 = vsyncpa %s710, 1
    %712 = vsyncpa [#allocation6], 1
    %713 = vsyncpa [#allocation4], 1
    %s714 = scalar_lea.sflag [#allocation4], 1
    %715 = vsyncpa %s714, 1
    %716 = vsyncpa [#allocation10], 1
    %s717 = scalar_lea.sflag [#allocation10], 1
    %718 = vsyncpa %s717, 1

</llo_original>
